<compile_context>
chip_gen: v6e
topology: v6e:2x2x1
jax: 0.10.0
libtpu: 0.0.40
codegen_flags: <defaults>
</compile_context>

<pallas_src>
import jax
import jax.numpy as jnp
from jax.experimental import pallas as pl
from jax.experimental.pallas import tpu as pltpu

# -------------------- model hyper-parameters (small, synthetic) -------------
N          = 8        # number of graph nodes
NFEAT      = 16
NHID1      = 32
NHID2      = 8
N_CLUSTERS = 4
DROPOUT_P  = 0.5
ALPHA      = 0.2
OUT_LANES  = 128      # lane-dense output slab width


def _gc_dec_kernel(x_ref, adj_ref, w1_ref, b1_ref, w2_ref, b2_ref,
                   mu_ref, drop_ref, out_ref):
    x   = x_ref[...]          # (N, NFEAT)  f32
    adj = adj_ref[...]        # (N, N)      f32

    # ---- gc1: (adj @ x) @ W1 + b1, then ReLU (reassociated, same result) ---
    ax = jnp.dot(adj, x, preferred_element_type=jnp.float32)          # (N, NFEAT)
    h  = jnp.dot(ax, w1_ref[...], preferred_element_type=jnp.float32) # (N, NHID1)
    h  = h + b1_ref[...]
    h  = jnp.maximum(h, 0.0)

    # ---- dropout (training=True): precomputed scaled keep mask -------------
    # drop_ref holds 0.0 or 1/(1-p), so this is a single VPU multiply.
    h = h * drop_ref[...]

    # ---- gc2: adj @ (h @ W2) + b2  (NHID2 < NHID1, already the cheap order) -
    hw = jnp.dot(h, w2_ref[...], preferred_element_type=jnp.float32)  # (N, NHID2)
    z  = jnp.dot(adj, hw, preferred_element_type=jnp.float32) + b2_ref[...]

    # ---- soft assignment q (Student-t kernel) -------------------------------
    # d2 = ||z||^2 + ||mu||^2 - 2 * z @ mu^T   (MXU matmul instead of K lane-reductions)
    mu    = mu_ref[...]                                                # (K, NHID2)
    z_sq  = jnp.sum(z * z, axis=1, keepdims=True)                      # (N, 1)
    mu_sq = jnp.sum(mu * mu, axis=1)[None, :]                          # (1, K)
    cross = jnp.einsum('nd,kd->nk', z, mu,
                       preferred_element_type=jnp.float32)             # (N, K)
    d2 = z_sq + mu_sq - 2.0 * cross

    # q = (1/(1 + d2/alpha + 1e-6))**(alpha+1) / 2, row-normalized.
    # The /2 cancels in the normalization; single negative-exponent pow.
    q = (1.0 + d2 / ALPHA + 1e-06) ** (-(ALPHA + 1.0))
    q = q / jnp.sum(q, axis=1, keepdims=True)

    # ---- single lane-dense store: [ z | q | zero-pad ] ----------------------
    pad = jnp.zeros((N, OUT_LANES - NHID2 - N_CLUSTERS), jnp.float32)
    out_ref[...] = jnp.concatenate([z, q, pad], axis=1)


def gc_dec_forward(x, adj, w1, b1, w2, b2, mu, drop_mask):
    """Whole forward pass in one Pallas invocation (everything fits in VMEM)."""
    vmem = pl.BlockSpec(memory_space=pltpu.MemorySpace.VMEM)
    out = pl.pallas_call(
        _gc_dec_kernel,
        out_shape=jax.ShapeDtypeStruct((N, OUT_LANES), jnp.float32),
        in_specs=[vmem] * 8,
        out_specs=vmem,
    )(x, adj, w1, b1, w2, b2, mu, drop_mask)
    z = out[:, :NHID2]
    q = out[:, NHID2:NHID2 + N_CLUSTERS]
    return z, q


def _init_params(key):
    """Deterministic parameter init mirroring GraphConvolution.reset_parameters
    (uniform(-stdv, stdv) with stdv = 1/sqrt(out_features)) and a random mu."""
    k1, k2, k3, k4, k5 = jax.random.split(key, 5)
    stdv1 = 1.0 / jnp.sqrt(NHID1)
    stdv2 = 1.0 / jnp.sqrt(NHID2)
    w1 = jax.random.uniform(k1, (NFEAT, NHID1), jnp.float32, -stdv1, stdv1)
    b1 = jax.random.uniform(k2, (1, NHID1), jnp.float32, -stdv1, stdv1)
    w2 = jax.random.uniform(k3, (NHID1, NHID2), jnp.float32, -stdv2, stdv2)
    b2 = jax.random.uniform(k4, (1, NHID2), jnp.float32, -stdv2, stdv2)
    mu = jax.random.normal(k5, (N_CLUSTERS, NHID2), jnp.float32)
    return w1, b1, w2, b2, mu


def _reference_forward(x, adj, w1, b1, w2, b2, mu, drop_mask):
    """Pure-JAX reference with the original op order / direct distance form."""
    h = jnp.maximum(adj @ (x @ w1) + b1, 0.0)
    h = h * drop_mask
    z = adj @ (h @ w2) + b2
    d2 = jnp.sum((z[:, None, :] - mu[None, :, :]) ** 2, axis=2)
    q = 1.0 / (1.0 + d2 / ALPHA + 1e-06)
    q = q ** (ALPHA + 1.0) / 2.0
    q = q / jnp.sum(q, axis=1, keepdims=True)
    return z, q


if __name__ == "__main__":
    key = jax.random.PRNGKey(0)
    kx, kadj, kparams, kdrop = jax.random.split(key, 4)

    # node features
    x = jax.random.normal(kx, (N, NFEAT), jnp.float32)

    # deterministic symmetric row-normalized adjacency (with self loops)
    a = jax.random.uniform(kadj, (N, N), jnp.float32)
    a = (a + a.T) * 0.5 + jnp.eye(N, dtype=jnp.float32)
    adj = a / jnp.sum(a, axis=1, keepdims=True)

    w1, b1, w2, b2, mu = _init_params(kparams)

    # dropout keep mask (training=True), inverted-dropout scaling, host-side PRNG
    keep = jax.random.bernoulli(kdrop, 1.0 - DROPOUT_P, (N, NHID1))
    drop_mask = keep.astype(jnp.float32) * (1.0 / (1.0 - DROPOUT_P))

    z, q = gc_dec_forward(x, adj, w1, b1, w2, b2, mu, drop_mask)
    jax.block_until_ready((z, q))

    assert z.shape == (N, NHID2) and q.shape == (N, N_CLUSTERS)

    # numerical sanity check against the direct (un-reassociated) formulation
    z_ref, q_ref = _reference_forward(x, adj, w1, b1, w2, b2, mu, drop_mask)
    assert jnp.allclose(z, z_ref, rtol=2e-3, atol=2e-3)
    assert jnp.allclose(q, q_ref, rtol=2e-3, atol=2e-3)

    print("KERNEL_OK")
</pallas_src>

<mosaic_0001>
module attributes {stable_mosaic.version = 11 : i64} {
  func.func @_gc_dec_kernel(%arg0: memref<8x16xf32, #tpu.memory_space<vmem>>, %arg1: memref<8x8xf32, #tpu.memory_space<vmem>>, %arg2: memref<16x32xf32, #tpu.memory_space<vmem>>, %arg3: memref<1x32xf32, #tpu.memory_space<vmem>>, %arg4: memref<32x8xf32, #tpu.memory_space<vmem>>, %arg5: memref<1x8xf32, #tpu.memory_space<vmem>>, %arg6: memref<4x8xf32, #tpu.memory_space<vmem>>, %arg7: memref<8x32xf32, #tpu.memory_space<vmem>>, %arg8: memref<8x128xf32, #tpu.memory_space<vmem>>) attributes {dimension_semantics = [], scalar_prefetch = 0 : i64, scratch_operands = 0 : i64, tpu.core_type = #tpu.core_type<tc>} {
    %c0 = arith.constant 0 : index
    %c0_0 = arith.constant 0 : index
    %0 = vector.load %arg0[%c0, %c0_0] : memref<8x16xf32, #tpu.memory_space<vmem>>, vector<8x16xf32>
    %c0_1 = arith.constant 0 : index
    %c0_2 = arith.constant 0 : index
    %1 = vector.load %arg1[%c0_1, %c0_2] : memref<8x8xf32, #tpu.memory_space<vmem>>, vector<8x8xf32>
    %cst = arith.constant dense<0.000000e+00> : vector<8x16xf32>
    %2 = tpu.matmul %1, %0, %cst {dimension_numbers = #tpu.dot_dimension_numbers<[1], [0], [0], [1], [0, 0, 1, 1], [], []>} : vector<8x8xf32>, vector<8x16xf32>, vector<8x16xf32> -> vector<8x16xf32>
    %c0_3 = arith.constant 0 : index
    %c0_4 = arith.constant 0 : index
    %3 = vector.load %arg2[%c0_3, %c0_4] : memref<16x32xf32, #tpu.memory_space<vmem>>, vector<16x32xf32>
    %cst_5 = arith.constant dense<0.000000e+00> : vector<8x32xf32>
    %4 = tpu.matmul %2, %3, %cst_5 {dimension_numbers = #tpu.dot_dimension_numbers<[1], [0], [0], [1], [0, 0, 1, 1], [], []>} : vector<8x16xf32>, vector<16x32xf32>, vector<8x32xf32> -> vector<8x32xf32>
    %c0_6 = arith.constant 0 : index
    %c0_7 = arith.constant 0 : index
    %5 = vector.load %arg3[%c0_6, %c0_7] : memref<1x32xf32, #tpu.memory_space<vmem>>, vector<1x32xf32>
    %6 = vector.broadcast %5 : vector<1x32xf32> to vector<8x32xf32>
    %7 = arith.addf %4, %6 : vector<8x32xf32>
    %cst_8 = arith.constant 0.000000e+00 : f32
    %8 = vector.broadcast %cst_8 : f32 to vector<8x32xf32>
    %9 = arith.maximumf %7, %8 : vector<8x32xf32>
    %c0_9 = arith.constant 0 : index
    %c0_10 = arith.constant 0 : index
    %10 = vector.load %arg7[%c0_9, %c0_10] : memref<8x32xf32, #tpu.memory_space<vmem>>, vector<8x32xf32>
    %11 = arith.mulf %9, %10 : vector<8x32xf32>
    %c0_11 = arith.constant 0 : index
    %c0_12 = arith.constant 0 : index
    %12 = vector.load %arg4[%c0_11, %c0_12] : memref<32x8xf32, #tpu.memory_space<vmem>>, vector<32x8xf32>
    %cst_13 = arith.constant dense<0.000000e+00> : vector<8x8xf32>
    %13 = tpu.matmul %11, %12, %cst_13 {dimension_numbers = #tpu.dot_dimension_numbers<[1], [0], [0], [1], [0, 0, 1, 1], [], []>} : vector<8x32xf32>, vector<32x8xf32>, vector<8x8xf32> -> vector<8x8xf32>
    %cst_14 = arith.constant dense<0.000000e+00> : vector<8x8xf32>
    %14 = tpu.matmul %1, %13, %cst_14 {dimension_numbers = #tpu.dot_dimension_numbers<[1], [0], [0], [1], [0, 0, 1, 1], [], []>} : vector<8x8xf32>, vector<8x8xf32>, vector<8x8xf32> -> vector<8x8xf32>
    %c0_15 = arith.constant 0 : index
    %c0_16 = arith.constant 0 : index
    %15 = vector.load %arg5[%c0_15, %c0_16] : memref<1x8xf32, #tpu.memory_space<vmem>>, vector<1x8xf32>
    %16 = vector.broadcast %15 : vector<1x8xf32> to vector<8x8xf32>
    %17 = arith.addf %14, %16 : vector<8x8xf32>
    %c0_17 = arith.constant 0 : index
    %c0_18 = arith.constant 0 : index
    %18 = vector.load %arg6[%c0_17, %c0_18] : memref<4x8xf32, #tpu.memory_space<vmem>>, vector<4x8xf32>
    %19 = arith.mulf %17, %17 : vector<8x8xf32>
    %cst_19 = arith.constant dense<0.000000e+00> : vector<8xf32>
    %20 = vector.multi_reduction <add>, %19, %cst_19 [1] : vector<8x8xf32> to vector<8xf32>
    %21 = vector.shape_cast %20 : vector<8xf32> to vector<8x1xf32>
    %22 = arith.mulf %18, %18 : vector<4x8xf32>
    %cst_20 = arith.constant dense<0.000000e+00> : vector<4xf32>
    %23 = vector.multi_reduction <add>, %22, %cst_20 [1] : vector<4x8xf32> to vector<4xf32>
    %24 = vector.shape_cast %23 : vector<4xf32> to vector<1x4xf32>
    "tpu.trace_start"() <{level = 10 : i32, message = "nd,kd->nk"}> : () -> ()
    %cst_21 = arith.constant dense<0.000000e+00> : vector<8x4xf32>
    %25 = tpu.matmul %17, %18, %cst_21 {dimension_numbers = #tpu.dot_dimension_numbers<[1], [1], [0], [0], [0, 0, 1, 0], [], []>} : vector<8x8xf32>, vector<4x8xf32>, vector<8x4xf32> -> vector<8x4xf32>
    "tpu.trace_stop"() : () -> ()
    %26 = vector.broadcast %21 : vector<8x1xf32> to vector<8x4xf32>
    %27 = vector.broadcast %24 : vector<1x4xf32> to vector<8x4xf32>
    %28 = arith.addf %26, %27 : vector<8x4xf32>
    %cst_22 = arith.constant 2.000000e+00 : f32
    %29 = vector.broadcast %cst_22 : f32 to vector<8x4xf32>
    %30 = arith.mulf %29, %25 : vector<8x4xf32>
    %31 = arith.subf %28, %30 : vector<8x4xf32>
    %cst_23 = arith.constant 2.000000e-01 : f32
    %32 = vector.broadcast %cst_23 : f32 to vector<8x4xf32>
    %33 = arith.divf %31, %32 : vector<8x4xf32>
    %cst_24 = arith.constant 1.000000e+00 : f32
    %34 = vector.broadcast %cst_24 : f32 to vector<8x4xf32>
    %35 = arith.addf %34, %33 : vector<8x4xf32>
    %cst_25 = arith.constant 9.99999997E-7 : f32
    %36 = vector.broadcast %cst_25 : f32 to vector<8x4xf32>
    %37 = arith.addf %35, %36 : vector<8x4xf32>
    %cst_26 = arith.constant -1.200000e+00 : f32
    %38 = vector.broadcast %cst_26 : f32 to vector<8x4xf32>
    %39 = math.powf %37, %38 : vector<8x4xf32>
    %cst_27 = arith.constant dense<0.000000e+00> : vector<8xf32>
    %40 = vector.multi_reduction <add>, %39, %cst_27 [1] : vector<8x4xf32> to vector<8xf32>
    %41 = vector.shape_cast %40 : vector<8xf32> to vector<8x1xf32>
    %42 = vector.broadcast %41 : vector<8x1xf32> to vector<8x4xf32>
    %43 = arith.divf %39, %42 : vector<8x4xf32>
    %cst_28 = arith.constant 0.000000e+00 : f32
    %44 = vector.broadcast %cst_28 : f32 to vector<8x116xf32>
    %45 = tpu.concatenate %17, %43, %44 in 1 : vector<8x8xf32>, vector<8x4xf32>, vector<8x116xf32> -> vector<8x128xf32>
    %c0_29 = arith.constant 0 : index
    %c0_30 = arith.constant 0 : index
    %46 = vector.load %arg8[%c0_29, %c0_30] : memref<8x128xf32, #tpu.memory_space<vmem>>, vector<8x128xf32>
    tpu.vector_store %arg8[%c0_29, %c0_30], %45 {strides = array<i32>} : memref<8x128xf32, #tpu.memory_space<vmem>>, vector<8x128xf32>,
    return
  }
}

</mosaic_0001>

<llo_original>
// kernel: tpu_custom_call.1
$region0: #{tpu_custom_call.1}
  #allocation0 [shape = 'u32[]', space=smem, size = 0x4, offset = 0x4, fixed_abs, tag = 'smem constant byte address 0x4 - core index']
  #allocation1 [shape = 'u32[144,128]{1,0:T(1,128)}', space=vmem, size = 0x12000, scoped, tag = 'internal scratch']
  %s0 = inlined_call_operand.vmem [shape: f32[8,16], index: 0, kind: input, shape index: {}]
  %s1 = inlined_call_operand.vmem [shape: f32[8,8], index: 1, kind: input, shape index: {}]
  %s2 = inlined_call_operand.vmem [shape: f32[16,32], index: 2, kind: input, shape index: {}]
  %s3 = inlined_call_operand.vmem [shape: f32[1,32], index: 3, kind: input, shape index: {}]
  %s4 = inlined_call_operand.vmem [shape: f32[32,8], index: 4, kind: input, shape index: {}]
  %s5 = inlined_call_operand.vmem [shape: f32[1,8], index: 5, kind: input, shape index: {}]
  %s6 = inlined_call_operand.vmem [shape: f32[4,8], index: 6, kind: input, shape index: {}]
  %s7 = inlined_call_operand.vmem [shape: f32[8,32], index: 7, kind: input, shape index: {}]
  %s8 = inlined_call_operand.hbm [shape: f32[8,128], index: 8, kind: output, shape index: {}]
  %s9 = sld [smem:[#allocation0]]
  $region42: #{tpu_custom_call.1} parent=0
    _
  %s11 = ssub.s32 1, %s9
  %s12 = scalar_select 0, %s11, %s9
  $region1: #{tpu_custom_call.1} parent=0
    #allocation2 [shape = 'u8[4096]{0}', space=vmem, size = 0x1000, scoped, tag = 'output window, operand 0, single buffered']
    #allocation3 [shape = 's32[1]{0}', space=sflag, size = 0x4, scoped, tag = 'scoped memory for tpu_custom_call.1']
    %13 = vsyncpa [#allocation3], 0
    // Predicated region
    $region2: #{tpu_custom_call.1} parent=1 // pred_check
      _
    $region3: #{tpu_custom_call.1} parent=1 // pred_check_branch
      %15 = sbr.rel (0) target = $region5
    $region4: #{tpu_custom_call.1} parent=1 // pred_region
      _
    $region5: #{tpu_custom_call.1} parent=1 // pred_fallthru
      _
    // Predicated region
    $region6: #{tpu_custom_call.1} parent=1 // pred_check
      _
    $region7: #{tpu_custom_call.1} parent=1 // pred_check_branch
      %17 = sbr.rel (0) target = $region9
    $region8: #{tpu_custom_call.1} parent=1 // pred_region
      _
    $region9: #{tpu_custom_call.1} parent=1 // pred_fallthru
      _
    // Predicated region
    $region10: #{tpu_custom_call.1} parent=1 // pred_check
      _
    $region11: #{tpu_custom_call.1} parent=1 // pred_check_branch
      %19 = sbr.rel (0) target = $region13
    $region12: #{tpu_custom_call.1} parent=1 // pred_region
      _
    $region13: #{tpu_custom_call.1} parent=1 // pred_fallthru
      _
    // Predicated region
    $region14: #{tpu_custom_call.1} parent=1 // pred_check
      _
    $region15: #{tpu_custom_call.1} parent=1 // pred_check_branch
      %21 = sbr.rel (0) target = $region17
    $region16: #{tpu_custom_call.1} parent=1 // pred_region
      _
    $region17: #{tpu_custom_call.1} parent=1 // pred_fallthru
      _
    // Predicated region
    $region18: #{tpu_custom_call.1} parent=1 // pred_check
      _
    $region19: #{tpu_custom_call.1} parent=1 // pred_check_branch
      %23 = sbr.rel (0) target = $region21
    $region20: #{tpu_custom_call.1} parent=1 // pred_region
      _
    $region21: #{tpu_custom_call.1} parent=1 // pred_fallthru
      _
    // Predicated region
    $region22: #{tpu_custom_call.1} parent=1 // pred_check
      _
    $region23: #{tpu_custom_call.1} parent=1 // pred_check_branch
      %25 = sbr.rel (0) target = $region25
    $region24: #{tpu_custom_call.1} parent=1 // pred_region
      _
    $region25: #{tpu_custom_call.1} parent=1 // pred_fallthru
      _
    // Predicated region
    $region26: #{tpu_custom_call.1} parent=1 // pred_check
      _
    $region27: #{tpu_custom_call.1} parent=1 // pred_check_branch
      %27 = sbr.rel (0) target = $region29
    $region28: #{tpu_custom_call.1} parent=1 // pred_region
      _
    $region29: #{tpu_custom_call.1} parent=1 // pred_fallthru
      _
    // Predicated region
    $region30: #{tpu_custom_call.1} parent=1 // pred_check
      _
    $region31: #{tpu_custom_call.1} parent=1 // pred_check_branch
      %29 = sbr.rel (0) target = $region33
    $region32: #{tpu_custom_call.1} parent=1 // pred_region
      _
    $region33: #{tpu_custom_call.1} parent=1 // pred_fallthru
      _
    %v30 = vld [vmem:[%s0] sm:$0xff]
    %v31 = vld [vmem:[%s1] sm:$0xff]
    %vm32 = vcmask 64512
    %v34 = vsel %vm32, %v31, 0
    %36 = vmatprep.subr.mxu0 0.0
    %37 = vmatpush1.msra.mxu0 0.0
    %38 = vmatprep.subr.mxu0 0.0
    %39 = vmatpush1.msra.mxu0 0.0
    %40 = vmatprep.subr.mxu0 0.0
    %41 = vmatpush1.msra.mxu0 0.0
    %42 = vmatprep.subr.mxu0 0.0
    %43 = vmatpush1.msra.mxu0 0.0
    %44 = vmatprep.subr.mxu0 0.0
    %45 = vmatpush1.msra.mxu0 0.0
    %46 = vmatprep.subr.mxu0 0.0
    %47 = vmatpush1.msra.mxu0 0.0
    %48 = vmatprep.subr.mxu0 0.0
    %49 = vmatpush1.msra.mxu0 0.0
    %50 = vmatprep.subr.mxu0 0.0
    %51 = vmatpush1.msra.mxu0 0.0
    %52 = vmatprep.subr.mxu0 0.0
    %53 = vmatpush1.msra.mxu0 0.0
    %54 = vmatprep.subr.mxu0 0.0
    %55 = vmatpush1.msra.mxu0 0.0
    %56 = vmatprep.subr.mxu0 0.0
    %57 = vmatpush1.msra.mxu0 0.0
    %58 = vmatprep.subr.mxu0 0.0
    %59 = vmatpush1.msra.mxu0 0.0
    %60 = vmatprep.subr.mxu0 0.0
    %61 = vmatpush1.msra.mxu0 0.0
    %62 = vmatprep.subr.mxu0 0.0
    %63 = vmatpush1.msra.mxu0 0.0
    %64 = vmatprep.subr.mxu0 0.0
    %65 = vmatpush1.msra.mxu0 0.0
    %66 = vmatprep.subr.mxu0 0.0
    %67 = vmatpush1.msra.mxu0 %v30
    %68 = vmatprep.subr.mxu0 0.0
    %69 = vmatpush2.msra.mxu0 0.0
    %70 = vmatprep.subr.mxu0 0.0
    %71 = vmatpush2.msra.mxu0 0.0
    %72 = vmatprep.subr.mxu0 0.0
    %73 = vmatpush2.msra.mxu0 0.0
    %74 = vmatprep.subr.mxu0 0.0
    %75 = vmatpush2.msra.mxu0 0.0
    %76 = vmatprep.subr.mxu0 0.0
    %77 = vmatpush2.msra.mxu0 0.0
    %78 = vmatprep.subr.mxu0 0.0
    %79 = vmatpush2.msra.mxu0 0.0
    %80 = vmatprep.subr.mxu0 0.0
    %81 = vmatpush2.msra.mxu0 0.0
    %82 = vmatprep.subr.mxu0 0.0
    %83 = vmatpush2.msra.mxu0 0.0
    %84 = vmatprep.subr.mxu0 0.0
    %85 = vmatpush2.msra.mxu0 0.0
    %86 = vmatprep.subr.mxu0 0.0
    %87 = vmatpush2.msra.mxu0 0.0
    %88 = vmatprep.subr.mxu0 0.0
    %89 = vmatpush2.msra.mxu0 0.0
    %90 = vmatprep.subr.mxu0 0.0
    %91 = vmatpush2.msra.mxu0 0.0
    %92 = vmatprep.subr.mxu0 0.0
    %93 = vmatpush2.msra.mxu0 0.0
    %94 = vmatprep.subr.mxu0 0.0
    %95 = vmatpush2.msra.mxu0 0.0
    %96 = vmatprep.subr.mxu0 0.0
    %97 = vmatpush2.msra.mxu0 0.0
    %98 = vmatprep.subr.mxu0 0.0
    %99 = vmatpush2.msra.mxu0 0.0
    %100 = vmatprep.mubr.f32.mxu0 0.0
    %101 = vmatmul.mubr.f32.gmra.mxu0 %v34
    %v102 = vpop.f32.mrf.mxu0
    %v103 = vadd.f32 0.0, %v102
    %v104 = vpop.f32.mrf.mxu0
    %105 = vdwg.mxu0
    %v106 = vld [vmem:[%s2] sm:$0xff]
    %v107 = vld [vmem:[%s2 + $0x8] sm:$0xff]
    %v108 = vld [vmem:[%s3] sm:$0x1]
    %v110 = vlaneseq
    %v111 = vshrl.u32 %v110, 7
    %v112 = vsub.s32 0, %v111
    %v113 = vrot.slane %v108, %v112
    %vm115 = vcmask 130048
    %v117 = vsel %vm115, %v103, 0
    %119 = vmatprep.subr.mxu0 0.0
    %120 = vmatpush1.msra.mxu0 0.0
    %121 = vmatprep.subr.mxu0 0.0
    %122 = vmatpush1.msra.mxu0 0.0
    %123 = vmatprep.subr.mxu0 0.0
    %124 = vmatpush1.msra.mxu0 0.0
    %125 = vmatprep.subr.mxu0 0.0
    %126 = vmatpush1.msra.mxu0 0.0
    %127 = vmatprep.subr.mxu0 0.0
    %128 = vmatpush1.msra.mxu0 0.0
    %129 = vmatprep.subr.mxu0 0.0
    %130 = vmatpush1.msra.mxu0 0.0
    %131 = vmatprep.subr.mxu0 0.0
    %132 = vmatpush1.msra.mxu0 0.0
    %133 = vmatprep.subr.mxu0 0.0
    %134 = vmatpush1.msra.mxu0 0.0
    %135 = vmatprep.subr.mxu0 0.0
    %136 = vmatpush1.msra.mxu0 0.0
    %137 = vmatprep.subr.mxu0 0.0
    %138 = vmatpush1.msra.mxu0 0.0
    %139 = vmatprep.subr.mxu0 0.0
    %140 = vmatpush1.msra.mxu0 0.0
    %141 = vmatprep.subr.mxu0 0.0
    %142 = vmatpush1.msra.mxu0 0.0
    %143 = vmatprep.subr.mxu0 0.0
    %144 = vmatpush1.msra.mxu0 0.0
    %145 = vmatprep.subr.mxu0 0.0
    %146 = vmatpush1.msra.mxu0 0.0
    %147 = vmatprep.subr.mxu0 0.0
    %148 = vmatpush1.msra.mxu0 %v107
    %149 = vmatprep.subr.mxu0 0.0
    %150 = vmatpush1.msra.mxu0 %v106
    %151 = vmatprep.subr.mxu0 0.0
    %152 = vmatpush2.msra.mxu0 0.0
    %153 = vmatprep.subr.mxu0 0.0
    %154 = vmatpush2.msra.mxu0 0.0
    %155 = vmatprep.subr.mxu0 0.0
    %156 = vmatpush2.msra.mxu0 0.0
    %157 = vmatprep.subr.mxu0 0.0
    %158 = vmatpush2.msra.mxu0 0.0
    %159 = vmatprep.subr.mxu0 0.0
    %160 = vmatpush2.msra.mxu0 0.0
    %161 = vmatprep.subr.mxu0 0.0
    %162 = vmatpush2.msra.mxu0 0.0
    %163 = vmatprep.subr.mxu0 0.0
    %164 = vmatpush2.msra.mxu0 0.0
    %165 = vmatprep.subr.mxu0 0.0
    %166 = vmatpush2.msra.mxu0 0.0
    %167 = vmatprep.subr.mxu0 0.0
    %168 = vmatpush2.msra.mxu0 0.0
    %169 = vmatprep.subr.mxu0 0.0
    %170 = vmatpush2.msra.mxu0 0.0
    %171 = vmatprep.subr.mxu0 0.0
    %172 = vmatpush2.msra.mxu0 0.0
    %173 = vmatprep.subr.mxu0 0.0
    %174 = vmatpush2.msra.mxu0 0.0
    %175 = vmatprep.subr.mxu0 0.0
    %176 = vmatpush2.msra.mxu0 0.0
    %177 = vmatprep.subr.mxu0 0.0
    %178 = vmatpush2.msra.mxu0 0.0
    %179 = vmatprep.subr.mxu0 0.0
    %180 = vmatpush2.msra.mxu0 0.0
    %181 = vmatprep.subr.mxu0 0.0
    %182 = vmatpush2.msra.mxu0 0.0
    %183 = vmatprep.mubr.f32.mxu0 0.0
    %184 = vmatmul.mubr.f32.gmra.mxu0 %v117
    %v185 = vpop.f32.mrf.mxu0
    %v186 = vadd.f32 %v113, %v185
    %v187 = vpop.f32.mrf.mxu0
    %188 = vdwg.mxu0
    %v189 = vmax.f32 %v186, 0.0
    %v190 = vld [vmem:[%s7] sm:$0xff]
    %v191 = vmul.f32 %v189, %v190
    %v192 = vld [vmem:[%s4] sm:$0xff]
    %v193 = vld [vmem:[%s4 + $0x8] sm:$0xff]
    %v194 = vld [vmem:[%s4 + $0x10] sm:$0xff]
    %v195 = vld [vmem:[%s4 + $0x18] sm:$0xff]
    %vm196 = vcmask 261120
    %v198 = vsel %vm196, %v191, 0
    %200 = vmatprep.subr.mxu0 0.0
    %201 = vmatpush1.msra.mxu0 0.0
    %202 = vmatprep.subr.mxu0 0.0
    %203 = vmatpush1.msra.mxu0 0.0
    %204 = vmatprep.subr.mxu0 0.0
    %205 = vmatpush1.msra.mxu0 0.0
    %206 = vmatprep.subr.mxu0 0.0
    %207 = vmatpush1.msra.mxu0 0.0
    %208 = vmatprep.subr.mxu0 0.0
    %209 = vmatpush1.msra.mxu0 0.0
    %210 = vmatprep.subr.mxu0 0.0
    %211 = vmatpush1.msra.mxu0 0.0
    %212 = vmatprep.subr.mxu0 0.0
    %213 = vmatpush1.msra.mxu0 0.0
    %214 = vmatprep.subr.mxu0 0.0
    %215 = vmatpush1.msra.mxu0 0.0
    %216 = vmatprep.subr.mxu0 0.0
    %217 = vmatpush1.msra.mxu0 0.0
    %218 = vmatprep.subr.mxu0 0.0
    %219 = vmatpush1.msra.mxu0 0.0
    %220 = vmatprep.subr.mxu0 0.0
    %221 = vmatpush1.msra.mxu0 0.0
    %222 = vmatprep.subr.mxu0 0.0
    %223 = vmatpush1.msra.mxu0 0.0
    %224 = vmatprep.subr.mxu0 0.0
    %225 = vmatpush1.msra.mxu0 %v195
    %226 = vmatprep.subr.mxu0 0.0
    %227 = vmatpush1.msra.mxu0 %v194
    %228 = vmatprep.subr.mxu0 0.0
    %229 = vmatpush1.msra.mxu0 %v193
    %230 = vmatprep.subr.mxu0 0.0
    %231 = vmatpush1.msra.mxu0 %v192
    %232 = vmatprep.subr.mxu0 0.0
    %233 = vmatpush2.msra.mxu0 0.0
    %234 = vmatprep.subr.mxu0 0.0
    %235 = vmatpush2.msra.mxu0 0.0
    %236 = vmatprep.subr.mxu0 0.0
    %237 = vmatpush2.msra.mxu0 0.0
    %238 = vmatprep.subr.mxu0 0.0
    %239 = vmatpush2.msra.mxu0 0.0
    %240 = vmatprep.subr.mxu0 0.0
    %241 = vmatpush2.msra.mxu0 0.0
    %242 = vmatprep.subr.mxu0 0.0
    %243 = vmatpush2.msra.mxu0 0.0
    %244 = vmatprep.subr.mxu0 0.0
    %245 = vmatpush2.msra.mxu0 0.0
    %246 = vmatprep.subr.mxu0 0.0
    %247 = vmatpush2.msra.mxu0 0.0
    %248 = vmatprep.subr.mxu0 0.0
    %249 = vmatpush2.msra.mxu0 0.0
    %250 = vmatprep.subr.mxu0 0.0
    %251 = vmatpush2.msra.mxu0 0.0
    %252 = vmatprep.subr.mxu0 0.0
    %253 = vmatpush2.msra.mxu0 0.0
    %254 = vmatprep.subr.mxu0 0.0
    %255 = vmatpush2.msra.mxu0 0.0
    %256 = vmatprep.subr.mxu0 0.0
    %257 = vmatpush2.msra.mxu0 0.0
    %258 = vmatprep.subr.mxu0 0.0
    %259 = vmatpush2.msra.mxu0 0.0
    %260 = vmatprep.subr.mxu0 0.0
    %261 = vmatpush2.msra.mxu0 0.0
    %262 = vmatprep.subr.mxu0 0.0
    %263 = vmatpush2.msra.mxu0 0.0
    %264 = vmatprep.mubr.f32.mxu0 0.0
    %265 = vmatmul.mubr.f32.gmra.mxu0 %v198
    %v266 = vpop.f32.mrf.mxu0
    %v267 = vadd.f32 0.0, %v266
    %v268 = vpop.f32.mrf.mxu0
    %269 = vdwg.mxu0
    %v270 = vld [vmem:[%s5] sm:$0x1]
    %v272 = vlaneseq
    %v273 = vshrl.u32 %v272, 7
    %v274 = vsub.s32 0, %v273
    %v275 = vrot.slane %v270, %v274
    %277 = vmatprep.subr.mxu0 0.0
    %278 = vmatpush1.msra.mxu0 0.0
    %279 = vmatprep.subr.mxu0 0.0
    %280 = vmatpush1.msra.mxu0 0.0
    %281 = vmatprep.subr.mxu0 0.0
    %282 = vmatpush1.msra.mxu0 0.0
    %283 = vmatprep.subr.mxu0 0.0
    %284 = vmatpush1.msra.mxu0 0.0
    %285 = vmatprep.subr.mxu0 0.0
    %286 = vmatpush1.msra.mxu0 0.0
    %287 = vmatprep.subr.mxu0 0.0
    %288 = vmatpush1.msra.mxu0 0.0
    %289 = vmatprep.subr.mxu0 0.0
    %290 = vmatpush1.msra.mxu0 0.0
    %291 = vmatprep.subr.mxu0 0.0
    %292 = vmatpush1.msra.mxu0 0.0
    %293 = vmatprep.subr.mxu0 0.0
    %294 = vmatpush1.msra.mxu0 0.0
    %295 = vmatprep.subr.mxu0 0.0
    %296 = vmatpush1.msra.mxu0 0.0
    %297 = vmatprep.subr.mxu0 0.0
    %298 = vmatpush1.msra.mxu0 0.0
    %299 = vmatprep.subr.mxu0 0.0
    %300 = vmatpush1.msra.mxu0 0.0
    %301 = vmatprep.subr.mxu0 0.0
    %302 = vmatpush1.msra.mxu0 0.0
    %303 = vmatprep.subr.mxu0 0.0
    %304 = vmatpush1.msra.mxu0 0.0
    %305 = vmatprep.subr.mxu0 0.0
    %306 = vmatpush1.msra.mxu0 0.0
    %307 = vmatprep.subr.mxu0 0.0
    %308 = vmatpush1.msra.mxu0 %v267
    %309 = vmatprep.subr.mxu0 0.0
    %310 = vmatpush2.msra.mxu0 0.0
    %311 = vmatprep.subr.mxu0 0.0
    %312 = vmatpush2.msra.mxu0 0.0
    %313 = vmatprep.subr.mxu0 0.0
    %314 = vmatpush2.msra.mxu0 0.0
    %315 = vmatprep.subr.mxu0 0.0
    %316 = vmatpush2.msra.mxu0 0.0
    %317 = vmatprep.subr.mxu0 0.0
    %318 = vmatpush2.msra.mxu0 0.0
    %319 = vmatprep.subr.mxu0 0.0
    %320 = vmatpush2.msra.mxu0 0.0
    %321 = vmatprep.subr.mxu0 0.0
    %322 = vmatpush2.msra.mxu0 0.0
    %323 = vmatprep.subr.mxu0 0.0
    %324 = vmatpush2.msra.mxu0 0.0
    %325 = vmatprep.subr.mxu0 0.0
    %326 = vmatpush2.msra.mxu0 0.0
    %327 = vmatprep.subr.mxu0 0.0
    %328 = vmatpush2.msra.mxu0 0.0
    %329 = vmatprep.subr.mxu0 0.0
    %330 = vmatpush2.msra.mxu0 0.0
    %331 = vmatprep.subr.mxu0 0.0
    %332 = vmatpush2.msra.mxu0 0.0
    %333 = vmatprep.subr.mxu0 0.0
    %334 = vmatpush2.msra.mxu0 0.0
    %335 = vmatprep.subr.mxu0 0.0
    %336 = vmatpush2.msra.mxu0 0.0
    %337 = vmatprep.subr.mxu0 0.0
    %338 = vmatpush2.msra.mxu0 0.0
    %339 = vmatprep.subr.mxu0 0.0
    %340 = vmatpush2.msra.mxu0 0.0
    %341 = vmatprep.mubr.f32.mxu0 0.0
    %342 = vmatmul.mubr.f32.gmra.mxu0 %v34
    %v343 = vpop.f32.mrf.mxu0
    %v344 = vadd.f32 %v275, %v343
    %v345 = vpop.f32.mrf.mxu0
    %346 = vdwg.mxu0
    %v347 = vld [vmem:[%s6] sm:$0xf]
    %v348 = vmul.f32 %v344, %v344
    %v349 = vsel %vm32, %v348, 0.0
    %350 = vadd.xlane.f32.xlu0 %v349
    %v351 = vpop.xlane.xlu0 %350
    %v352 = vmul.f32 %v347, %v347
    %vm353 = vcmask 60416
    %v354 = vsel %vm353, %v352, 0.0
    %355 = vadd.xlane.f32.xlu0 %v354
    %v356 = vpop.xlane.xlu0 %355
    %v358 = vsel %vm32, %v344, 0
    %v361 = vsel %vm32, %v347, 0
    %363 = vmatprep.subr.mxu0 0.0
    %364 = vmatpush1.xpose.msra.mxu0 0.0
    %365 = vmatprep.subr.mxu0 0.0
    %366 = vmatpush1.xpose.msra.mxu0 0.0
    %367 = vmatprep.subr.mxu0 0.0
    %368 = vmatpush1.xpose.msra.mxu0 0.0
    %369 = vmatprep.subr.mxu0 0.0
    %370 = vmatpush1.xpose.msra.mxu0 0.0
    %371 = vmatprep.subr.mxu0 0.0
    %372 = vmatpush1.xpose.msra.mxu0 0.0
    %373 = vmatprep.subr.mxu0 0.0
    %374 = vmatpush1.xpose.msra.mxu0 0.0
    %375 = vmatprep.subr.mxu0 0.0
    %376 = vmatpush1.xpose.msra.mxu0 0.0
    %377 = vmatprep.subr.mxu0 0.0
    %378 = vmatpush1.xpose.msra.mxu0 0.0
    %379 = vmatprep.subr.mxu0 0.0
    %380 = vmatpush1.xpose.msra.mxu0 0.0
    %381 = vmatprep.subr.mxu0 0.0
    %382 = vmatpush1.xpose.msra.mxu0 0.0
    %383 = vmatprep.subr.mxu0 0.0
    %384 = vmatpush1.xpose.msra.mxu0 0.0
    %385 = vmatprep.subr.mxu0 0.0
    %386 = vmatpush1.xpose.msra.mxu0 0.0
    %387 = vmatprep.subr.mxu0 0.0
    %388 = vmatpush1.xpose.msra.mxu0 0.0
    %389 = vmatprep.subr.mxu0 0.0
    %390 = vmatpush1.xpose.msra.mxu0 0.0
    %391 = vmatprep.subr.mxu0 0.0
    %392 = vmatpush1.xpose.msra.mxu0 0.0
    %393 = vmatprep.subr.mxu0 0.0
    %394 = vmatpush1.xpose.msra.mxu0 %v361
    %395 = vmatprep.subr.mxu0 0.0
    %396 = vmatpush2.xpose.msra.mxu0 0.0
    %397 = vmatprep.subr.mxu0 0.0
    %398 = vmatpush2.xpose.msra.mxu0 0.0
    %399 = vmatprep.subr.mxu0 0.0
    %400 = vmatpush2.xpose.msra.mxu0 0.0
    %401 = vmatprep.subr.mxu0 0.0
    %402 = vmatpush2.xpose.msra.mxu0 0.0
    %403 = vmatprep.subr.mxu0 0.0
    %404 = vmatpush2.xpose.msra.mxu0 0.0
    %405 = vmatprep.subr.mxu0 0.0
    %406 = vmatpush2.xpose.msra.mxu0 0.0
    %407 = vmatprep.subr.mxu0 0.0
    %408 = vmatpush2.xpose.msra.mxu0 0.0
    %409 = vmatprep.subr.mxu0 0.0
    %410 = vmatpush2.xpose.msra.mxu0 0.0
    %411 = vmatprep.subr.mxu0 0.0
    %412 = vmatpush2.xpose.msra.mxu0 0.0
    %413 = vmatprep.subr.mxu0 0.0
    %414 = vmatpush2.xpose.msra.mxu0 0.0
    %415 = vmatprep.subr.mxu0 0.0
    %416 = vmatpush2.xpose.msra.mxu0 0.0
    %417 = vmatprep.subr.mxu0 0.0
    %418 = vmatpush2.xpose.msra.mxu0 0.0
    %419 = vmatprep.subr.mxu0 0.0
    %420 = vmatpush2.xpose.msra.mxu0 0.0
    %421 = vmatprep.subr.mxu0 0.0
    %422 = vmatpush2.xpose.msra.mxu0 0.0
    %423 = vmatprep.subr.mxu0 0.0
    %424 = vmatpush2.xpose.msra.mxu0 0.0
    %425 = vmatprep.subr.mxu0 0.0
    %426 = vmatpush2.xpose.msra.mxu0 0.0
    %427 = vmatprep.mubr.f32.mxu0 0.0
    %428 = vmatmul.mubr.f32.gmra.mxu0 %v358
    %v429 = vpop.f32.mrf.mxu0
    %v430 = vadd.f32 0.0, %v429
    %v431 = vpop.f32.mrf.mxu0
    %432 = vdwg.mxu0
    %v434 = vlaneseq
    %v435 = vand.u32 %v434, 127
    %v436 = vlaneseq
    %v437 = vshrl.u32 %v436, 7
    %v438 = vsub.s32 %v435, %v437
    %v439 = vrot.slane %v356, %v438
    %vm440 = vcmask 1042434
    %v441 = vsel %vm440, %v439, %v439
    %vm442 = vcmask 1043459
    %v443 = vsel %vm442, %v439, %v441
    %vm444 = vcmask 1044484
    %v445 = vsel %vm444, %v439, %v443
    %vm446 = vcmask 1045509
    %v447 = vsel %vm446, %v439, %v445
    %vm448 = vcmask 1046534
    %v449 = vsel %vm448, %v439, %v447
    %vm450 = vcmask 1047559
    %v451 = vsel %vm450, %v439, %v449
    %v453 = vadd.f32 %v351, %v451
    %v454 = vmul.f32 %v430, 2.0
    %v455 = vsub.f32 %v453, %v454
    %v456 = vrcp.pop 0.2
    %v457 = vmul.f32 %v455, %v456
    %v458 = vadd.f32 %v457, 1.0
    %v459 = vadd.f32 %v458, 1e-06
    %v460 = vpow.f32 %v459, -1.2
    %vm461 = vcmask 31744
    %v462 = vsel %vm461, %v460, 0.0
    %463 = vadd.xlane.f32.xlu0 %v462
    %v464 = vpop.xlane.xlu0 %463
    %v465 = vrcp.pop %v464
    %v466 = vmul.f32 %v460, %v465
    %468 = vrot.lane.b32.xlu0 %v466, 8
    %v469 = vpop.permute.xlu0 %468
    %v471 = vsel %vm32, %v344, %v469
    %vm472 = vcmask 97280
    %v473 = vsel %vm472, %v471, 0.0
    %474 = vst [vmem:[#allocation2] sm:$0xff] %v473
    // Predicated region
    $region34: #{tpu_custom_call.1} parent=1 // pred_check
      _
    $region35: #{tpu_custom_call.1} parent=1 // pred_check_branch
      %476 = sbr.rel (0) target = $region37
    $region36: #{tpu_custom_call.1} parent=1 // pred_region
      %s478 = ssub.s32 128, 128
      %479 = vsyncadd [#allocation3], %s478
      %s481 = sshll.u32 [#allocation2], 4
      %s482 = int_to_ptr.vmem [resolvable:$true] %s481
      %484 = dma.vmem_to_hbm [thread:$0]  %s482, 128, %s8, [#allocation3]
    $region37: #{tpu_custom_call.1} parent=1 // pred_fallthru
      _
    // Predicated region
    $region38: #{tpu_custom_call.1} parent=1 // pred_check
      _
    $region39: #{tpu_custom_call.1} parent=1 // pred_check_branch
      %486 = sbr.rel (0) target = $region41
    $region40: #{tpu_custom_call.1} parent=1 // pred_region
      %487 = dma.done [#allocation3], 128
    $region41: #{tpu_custom_call.1} parent=1 // pred_fallthru
      _
    %488 = vsyncpa [#allocation3], 1

</llo_original>
